<compile_context>
chip_gen: v7x
topology: tpu7x:2x2x1
jax: 0.10.0
libtpu: 0.0.40
codegen_flags: <defaults>
</compile_context>

<pallas_src>
import functools

import jax
import jax.numpy as jnp
from jax.experimental import pallas as pl
from jax.experimental.pallas import tpu as pltpu

LANES = 128
SUBLANES = 8
MAX_BLOCK_ROWS = 2048        # 2048 x 128 x 4B = 1 MiB per input per buffer
CORE_SPLIT = 2               # v7x has 2 TensorCores; harmless elsewhere
N_SUMS = 9  # [count, a1, a2, a3, rmse_sum, rmse_log_sum, log_count, abs_rel_sum, sq_rel_sum]


def _metrics_kernel(pred_ref, gt_ref, out_ref, acc_ref, *, tolerance, total,
                    block_rows, blocks_per_core):
    c = pl.program_id(0)          # core-split index ("parallel")
    i = pl.program_id(1)          # row-block index within this core ("arbitrary")

    @pl.when(i == 0)
    def _():
        acc_ref[...] = jnp.zeros_like(acc_ref)

    pred = pred_ref[...]          # (block_rows, 128) f32
    gt = gt_ref[...]

    # Global element index of every lane in this tile.  Masks the <(8*128) pad
    # tail, the garbage rows of a partial boundary block, and whole blocks past
    # the end introduced by the core split.
    blk = c * blocks_per_core + i
    row = jax.lax.broadcasted_iota(jnp.int32, pred.shape, 0)
    lane = jax.lax.broadcasted_iota(jnp.int32, pred.shape, 1)
    gidx = (blk * block_rows + row) * LANES + lane
    mask = (gidx < total) & (gt > tolerance)

    # Two exact reciprocals instead of four divides.
    inv_gt = 1.0 / gt
    inv_pred = 1.0 / pred
    ratio = jnp.maximum(gt * inv_pred, pred * inv_gt)
    diff = gt - pred
    sq = diff * diff
    # ratio >= 1 for valid pred/gt, so |log gt - log pred| == log(ratio); this
    # preserves the reference NaN (pred < 0) / +inf (pred == 0) behavior.
    log_r = jnp.log(ratio)
    log_ok = mask & (log_r == log_r)          # drop NaNs (nanmean semantics)

    one = jnp.float32(1.0)
    zero = jnp.float32(0.0)
    parts = (
        jnp.where(mask, one, zero),                        # valid count
        jnp.where(mask & (ratio < 1.25), one, zero),       # a1
        jnp.where(mask & (ratio < 1.25 ** 2), one, zero),  # a2
        jnp.where(mask & (ratio < 1.25 ** 3), one, zero),  # a3
        jnp.where(mask, sq, zero),                         # rmse sum
        jnp.where(log_ok, log_r, zero),                    # rmse_log sum
        jnp.where(log_ok, one, zero),                      # rmse_log count
        jnp.where(mask, jnp.abs(diff) * inv_gt, zero),     # abs_rel sum
        jnp.where(mask, sq * inv_gt, zero),                # sq_rel sum
    )

    # Per-lane partial sums: fold rows in groups of 8 sublanes -> pure VALU
    # vreg adds into the persistent (8, 128) accumulator of each metric.
    sub = block_rows // SUBLANES
    for k, p in enumerate(parts):
        acc_ref[k] += jnp.sum(p.reshape(sub, SUBLANES, LANES), axis=0)

    @pl.when(i == pl.num_programs(1) - 1)
    def _():
        out_ref[...] = acc_ref[...]


def depth_metrics(pred, gt, tolerance: float = 0.1):
    pred = jnp.asarray(pred, jnp.float32)
    gt = jnp.asarray(gt, jnp.float32)

    if pred.shape != gt.shape:
        # Mirrors torch interpolate(mode='bilinear', align_corners=False) on a 2-D pred.
        # TODO(synk): jax.image.resize half-pixel bilinear may differ by ~1 ulp at borders
        # from torch's implementation.
        gt = jnp.squeeze(gt)
        pred = jax.image.resize(pred, gt.shape[-2:], method="bilinear", antialias=False)

    flat_pred = pred.reshape(-1)
    flat_gt = gt.reshape(-1)
    total = int(flat_gt.shape[0])

    # Pad only when the element count is not (8*128)-aligned (rare for real
    # depth maps); padded elements are excluded in-kernel by the gidx mask.
    quant = SUBLANES * LANES
    if total % quant != 0:
        pad = quant - total % quant
        flat_pred = jnp.pad(flat_pred, (0, pad), constant_values=1.0)
        flat_gt = jnp.pad(flat_gt, (0, pad), constant_values=0.0)

    rows = flat_pred.shape[0] // LANES          # multiple of 8
    p2 = flat_pred.reshape(rows, LANES)
    g2 = flat_gt.reshape(rows, LANES)

    block_rows = min(MAX_BLOCK_ROWS, rows)      # multiple of 8, <= rows
    n_blocks = -(-rows // block_rows)
    blocks_per_core = -(-n_blocks // CORE_SPLIT)

    def in_map(c, i):
        # Clamp so logical blocks past the end re-read the last real block;
        # their contribution is zeroed by the gidx mask in the kernel.
        return (jnp.minimum(c * blocks_per_core + i, n_blocks - 1), 0)

    partials = pl.pallas_call(
        functools.partial(
            _metrics_kernel,
            tolerance=float(tolerance),
            total=total,
            block_rows=block_rows,
            blocks_per_core=blocks_per_core,
        ),
        out_shape=jax.ShapeDtypeStruct(
            (CORE_SPLIT, N_SUMS, SUBLANES, LANES), jnp.float32
        ),
        grid_spec=pltpu.PrefetchScalarGridSpec(
            num_scalar_prefetch=0,
            grid=(CORE_SPLIT, blocks_per_core),
            in_specs=[
                pl.BlockSpec((block_rows, LANES), in_map),
                pl.BlockSpec((block_rows, LANES), in_map),
            ],
            out_specs=pl.BlockSpec(
                (None, N_SUMS, SUBLANES, LANES), lambda c, i: (c, 0, 0, 0)
            ),
            scratch_shapes=[pltpu.VMEM((N_SUMS, SUBLANES, LANES), jnp.float32)],
        ),
        compiler_params=pltpu.CompilerParams(
            dimension_semantics=("parallel", "arbitrary")
        ),
    )(p2, g2)

    # Single final cross-lane / cross-core reduction in plain JAX.
    sums = jnp.sum(partials, axis=(0, 2, 3))

    count = sums[0]
    a1 = sums[1] / count
    a2 = sums[2] / count
    a3 = sums[3] / count
    rmse = jnp.sqrt(sums[4] / count)
    rmse_log = sums[5] / sums[6]
    abs_rel = sums[7] / count
    sq_rel = sums[8] / count
    return abs_rel, sq_rel, rmse, rmse_log, a1, a2, a3


def _reference_metrics(pred, gt, tolerance: float = 0.1):
    # Plain-JAX (eager) transcription of the PyTorch module for verification.
    mask = gt > tolerance
    pm = pred[mask]
    gm = gt[mask]
    thresh = jnp.maximum(gm / pm, pm / gm)
    a1 = jnp.mean((thresh < 1.25).astype(jnp.float32))
    a2 = jnp.mean((thresh < 1.25 ** 2).astype(jnp.float32))
    a3 = jnp.mean((thresh < 1.25 ** 3).astype(jnp.float32))
    rmse = jnp.sqrt(jnp.mean((gm - pm) ** 2))
    rmse_log = jnp.nanmean(jnp.sqrt((jnp.log(gm) - jnp.log(pm)) ** 2))
    abs_rel = jnp.mean(jnp.abs(gm - pm) / gm)
    sq_rel = jnp.mean((gm - pm) ** 2 / gm)
    return abs_rel, sq_rel, rmse, rmse_log, a1, a2, a3


if __name__ == "__main__":
    key = jax.random.PRNGKey(0)
    k_gt, k_mul = jax.random.split(key)

    shape = (2, 4, 16, 16)
    # gt depths in [0, 2): some fall below tolerance=0.1 and get masked out.
    gt = jax.random.uniform(k_gt, shape, jnp.float32, minval=0.0, maxval=2.0)
    # pred = gt perturbed multiplicatively so a1/a2/a3 are non-trivial.
    pred = gt * jax.random.uniform(k_mul, shape, jnp.float32, minval=0.7, maxval=1.4) + 1e-3

    out = depth_metrics(pred, gt, tolerance=0.1)
    out = jax.block_until_ready(out)

    ref = _reference_metrics(pred, gt, tolerance=0.1)
    for name, got, want in zip(
        ("abs_rel", "sq_rel", "rmse", "rmse_log", "a1", "a2", "a3"), out, ref
    ):
        assert jnp.allclose(got, want, rtol=1e-4, atol=1e-4), (name, got, want)

    print("KERNEL_OK")
</pallas_src>

<mosaic_0001>
module attributes {stable_mosaic.version = 11 : i64} {
  func.func @_metrics_kernel(%arg0: i32, %arg1: i32, %arg2: memref<16x128xf32, #tpu.memory_space<vmem>>, %arg3: memref<16x128xf32, #tpu.memory_space<vmem>>, %arg4: memref<1x9x8x128xf32, #tpu.memory_space<vmem>>, %arg5: memref<9x8x128xf32, #tpu.memory_space<vmem>>) attributes {dimension_semantics = [#tpu.dimension_semantics<parallel>, #tpu.dimension_semantics<arbitrary>], iteration_bounds = array<i64: 2, 1>, scalar_prefetch = 0 : i64, scratch_operands = 1 : i64, tpu.core_type = #tpu.core_type<tc>, window_params = [{transform_indices = @transform_0, window_bounds = array<i64: 16, 128>}, {transform_indices = @transform_1, window_bounds = array<i64: 16, 128>}, {transform_indices = @transform_2, window_bounds = array<i64: 1, 9, 8, 128>}]} {
    %c0_i32 = arith.constant 0 : i32
    %0 = arith.cmpi eq, %arg1, %c0_i32 : i32
    %1 = arith.extui %0 : i1 to i32
    %c0_i32_0 = arith.constant 0 : i32
    %2 = arith.cmpi ne, %1, %c0_i32_0 : i32
    scf.if %2 {
      %cst_80 = arith.constant 0.000000e+00 : f32
      %142 = vector.broadcast %cst_80 : f32 to vector<9x8x128xf32>
      %c0_81 = arith.constant 0 : index
      %c0_82 = arith.constant 0 : index
      %c0_83 = arith.constant 0 : index
      %143 = vector.load %arg5[%c0_81, %c0_82, %c0_83] : memref<9x8x128xf32, #tpu.memory_space<vmem>>, vector<9x8x128xf32>
      tpu.vector_store %arg5[%c0_81, %c0_82, %c0_83], %142 {strides = array<i32>} : memref<9x8x128xf32, #tpu.memory_space<vmem>>, vector<9x8x128xf32>,
    } else {
    }
    %c0 = arith.constant 0 : index
    %c0_1 = arith.constant 0 : index
    %3 = vector.load %arg2[%c0, %c0_1] : memref<16x128xf32, #tpu.memory_space<vmem>>, vector<16x128xf32>
    %c0_2 = arith.constant 0 : index
    %c0_3 = arith.constant 0 : index
    %4 = vector.load %arg3[%c0_2, %c0_3] : memref<16x128xf32, #tpu.memory_space<vmem>>, vector<16x128xf32>
    %c1_i32 = arith.constant 1 : i32
    %5 = arith.muli %arg0, %c1_i32 : i32
    %6 = arith.addi %5, %arg1 : i32
    %7 = tpu.iota {dimensions = array<i32: 0>} : vector<16x128xi32>
    %8 = tpu.iota {dimensions = array<i32: 1>} : vector<16x128xi32>
    %c16_i32 = arith.constant 16 : i32
    %9 = arith.muli %6, %c16_i32 : i32
    %10 = vector.broadcast %9 : i32 to vector<16x128xi32>
    %11 = arith.addi %10, %7 : vector<16x128xi32>
    %c128_i32 = arith.constant 128 : i32
    %12 = vector.broadcast %c128_i32 : i32 to vector<16x128xi32>
    %13 = arith.muli %11, %12 : vector<16x128xi32>
    %14 = arith.addi %13, %8 : vector<16x128xi32>
    %c2048_i32 = arith.constant 2048 : i32
    %15 = vector.broadcast %c2048_i32 : i32 to vector<16x128xi32>
    %16 = arith.cmpi slt, %14, %15 : vector<16x128xi32>
    %cst = arith.constant 1.000000e-01 : f32
    %17 = vector.broadcast %cst : f32 to vector<16x128xf32>
    %18 = arith.cmpf ogt, %4, %17 : vector<16x128xf32>
    %19 = arith.andi %16, %18 : vector<16x128xi1>
    %cst_4 = arith.constant 1.000000e+00 : f32
    %20 = vector.broadcast %cst_4 : f32 to vector<16x128xf32>
    %21 = arith.divf %20, %4 : vector<16x128xf32>
    %cst_5 = arith.constant 1.000000e+00 : f32
    %22 = vector.broadcast %cst_5 : f32 to vector<16x128xf32>
    %23 = arith.divf %22, %3 : vector<16x128xf32>
    %24 = arith.mulf %4, %23 : vector<16x128xf32>
    %25 = arith.mulf %3, %21 : vector<16x128xf32>
    %26 = arith.maximumf %24, %25 : vector<16x128xf32>
    %27 = arith.subf %4, %3 : vector<16x128xf32>
    %28 = arith.mulf %27, %27 : vector<16x128xf32>
    %29 = math.log %26 : vector<16x128xf32>
    %30 = arith.cmpf oeq, %29, %29 : vector<16x128xf32>
    %31 = arith.andi %19, %30 : vector<16x128xi1>
    %cst_6 = arith.constant 1.000000e+00 : f32
    %cst_7 = arith.constant 0.000000e+00 : f32
    %32 = vector.broadcast %cst_6 : f32 to vector<16x128xf32>
    %33 = vector.broadcast %cst_7 : f32 to vector<16x128xf32>
    %34 = arith.select %19, %32, %33 : vector<16x128xi1>, vector<16x128xf32>
    %cst_8 = arith.constant 1.250000e+00 : f32
    %35 = vector.broadcast %cst_8 : f32 to vector<16x128xf32>
    %36 = arith.cmpf olt, %26, %35 : vector<16x128xf32>
    %37 = arith.andi %19, %36 : vector<16x128xi1>
    %cst_9 = arith.constant 1.000000e+00 : f32
    %cst_10 = arith.constant 0.000000e+00 : f32
    %38 = vector.broadcast %cst_9 : f32 to vector<16x128xf32>
    %39 = vector.broadcast %cst_10 : f32 to vector<16x128xf32>
    %40 = arith.select %37, %38, %39 : vector<16x128xi1>, vector<16x128xf32>
    %cst_11 = arith.constant 1.562500e+00 : f32
    %41 = vector.broadcast %cst_11 : f32 to vector<16x128xf32>
    %42 = arith.cmpf olt, %26, %41 : vector<16x128xf32>
    %43 = arith.andi %19, %42 : vector<16x128xi1>
    %cst_12 = arith.constant 1.000000e+00 : f32
    %cst_13 = arith.constant 0.000000e+00 : f32
    %44 = vector.broadcast %cst_12 : f32 to vector<16x128xf32>
    %45 = vector.broadcast %cst_13 : f32 to vector<16x128xf32>
    %46 = arith.select %43, %44, %45 : vector<16x128xi1>, vector<16x128xf32>
    %cst_14 = arith.constant 1.953125 : f32
    %47 = vector.broadcast %cst_14 : f32 to vector<16x128xf32>
    %48 = arith.cmpf olt, %26, %47 : vector<16x128xf32>
    %49 = arith.andi %19, %48 : vector<16x128xi1>
    %cst_15 = arith.constant 1.000000e+00 : f32
    %cst_16 = arith.constant 0.000000e+00 : f32
    %50 = vector.broadcast %cst_15 : f32 to vector<16x128xf32>
    %51 = vector.broadcast %cst_16 : f32 to vector<16x128xf32>
    %52 = arith.select %49, %50, %51 : vector<16x128xi1>, vector<16x128xf32>
    %cst_17 = arith.constant 0.000000e+00 : f32
    %53 = vector.broadcast %cst_17 : f32 to vector<16x128xf32>
    %54 = arith.select %19, %28, %53 : vector<16x128xi1>, vector<16x128xf32>
    %cst_18 = arith.constant 0.000000e+00 : f32
    %55 = vector.broadcast %cst_18 : f32 to vector<16x128xf32>
    %56 = arith.select %31, %29, %55 : vector<16x128xi1>, vector<16x128xf32>
    %cst_19 = arith.constant 1.000000e+00 : f32
    %cst_20 = arith.constant 0.000000e+00 : f32
    %57 = vector.broadcast %cst_19 : f32 to vector<16x128xf32>
    %58 = vector.broadcast %cst_20 : f32 to vector<16x128xf32>
    %59 = arith.select %31, %57, %58 : vector<16x128xi1>, vector<16x128xf32>
    %60 = math.absf %27 : vector<16x128xf32>
    %61 = arith.mulf %60, %21 : vector<16x128xf32>
    %cst_21 = arith.constant 0.000000e+00 : f32
    %62 = vector.broadcast %cst_21 : f32 to vector<16x128xf32>
    %63 = arith.select %19, %61, %62 : vector<16x128xi1>, vector<16x128xf32>
    %64 = arith.mulf %28, %21 : vector<16x128xf32>
    %cst_22 = arith.constant 0.000000e+00 : f32
    %65 = vector.broadcast %cst_22 : f32 to vector<16x128xf32>
    %66 = arith.select %19, %64, %65 : vector<16x128xi1>, vector<16x128xf32>
    %c0_23 = arith.constant 0 : index
    %c0_24 = arith.constant 0 : index
    %c0_25 = arith.constant 0 : index
    %67 = vector.load %arg5[%c0_23, %c0_24, %c0_25] : memref<9x8x128xf32, #tpu.memory_space<vmem>>, vector<1x8x128xf32>
    %68 = vector.shape_cast %67 : vector<1x8x128xf32> to vector<8x128xf32>
    %69 = vector.shape_cast %34 : vector<16x128xf32> to vector<2x8x128xf32>
    %cst_26 = arith.constant dense<0.000000e+00> : vector<8x128xf32>
    %70 = vector.multi_reduction <add>, %69, %cst_26 [0] : vector<2x8x128xf32> to vector<8x128xf32>
    %71 = arith.addf %68, %70 : vector<8x128xf32>
    %c0_27 = arith.constant 0 : index
    %c0_28 = arith.constant 0 : index
    %c0_29 = arith.constant 0 : index
    %72 = vector.load %arg5[%c0_27, %c0_28, %c0_29] : memref<9x8x128xf32, #tpu.memory_space<vmem>>, vector<1x8x128xf32>
    %73 = vector.shape_cast %72 : vector<1x8x128xf32> to vector<8x128xf32>
    %74 = vector.shape_cast %71 : vector<8x128xf32> to vector<1x8x128xf32>
    tpu.vector_store %arg5[%c0_27, %c0_28, %c0_29], %74 {strides = array<i32>} : memref<9x8x128xf32, #tpu.memory_space<vmem>>, vector<1x8x128xf32>,
    %c1 = arith.constant 1 : index
    %c0_30 = arith.constant 0 : index
    %c0_31 = arith.constant 0 : index
    %75 = vector.load %arg5[%c1, %c0_30, %c0_31] : memref<9x8x128xf32, #tpu.memory_space<vmem>>, vector<1x8x128xf32>
    %76 = vector.shape_cast %75 : vector<1x8x128xf32> to vector<8x128xf32>
    %77 = vector.shape_cast %40 : vector<16x128xf32> to vector<2x8x128xf32>
    %cst_32 = arith.constant dense<0.000000e+00> : vector<8x128xf32>
    %78 = vector.multi_reduction <add>, %77, %cst_32 [0] : vector<2x8x128xf32> to vector<8x128xf32>
    %79 = arith.addf %76, %78 : vector<8x128xf32>
    %c1_33 = arith.constant 1 : index
    %c0_34 = arith.constant 0 : index
    %c0_35 = arith.constant 0 : index
    %80 = vector.load %arg5[%c1_33, %c0_34, %c0_35] : memref<9x8x128xf32, #tpu.memory_space<vmem>>, vector<1x8x128xf32>
    %81 = vector.shape_cast %80 : vector<1x8x128xf32> to vector<8x128xf32>
    %82 = vector.shape_cast %79 : vector<8x128xf32> to vector<1x8x128xf32>
    tpu.vector_store %arg5[%c1_33, %c0_34, %c0_35], %82 {strides = array<i32>} : memref<9x8x128xf32, #tpu.memory_space<vmem>>, vector<1x8x128xf32>,
    %c2 = arith.constant 2 : index
    %c0_36 = arith.constant 0 : index
    %c0_37 = arith.constant 0 : index
    %83 = vector.load %arg5[%c2, %c0_36, %c0_37] : memref<9x8x128xf32, #tpu.memory_space<vmem>>, vector<1x8x128xf32>
    %84 = vector.shape_cast %83 : vector<1x8x128xf32> to vector<8x128xf32>
    %85 = vector.shape_cast %46 : vector<16x128xf32> to vector<2x8x128xf32>
    %cst_38 = arith.constant dense<0.000000e+00> : vector<8x128xf32>
    %86 = vector.multi_reduction <add>, %85, %cst_38 [0] : vector<2x8x128xf32> to vector<8x128xf32>
    %87 = arith.addf %84, %86 : vector<8x128xf32>
    %c2_39 = arith.constant 2 : index
    %c0_40 = arith.constant 0 : index
    %c0_41 = arith.constant 0 : index
    %88 = vector.load %arg5[%c2_39, %c0_40, %c0_41] : memref<9x8x128xf32, #tpu.memory_space<vmem>>, vector<1x8x128xf32>
    %89 = vector.shape_cast %88 : vector<1x8x128xf32> to vector<8x128xf32>
    %90 = vector.shape_cast %87 : vector<8x128xf32> to vector<1x8x128xf32>
    tpu.vector_store %arg5[%c2_39, %c0_40, %c0_41], %90 {strides = array<i32>} : memref<9x8x128xf32, #tpu.memory_space<vmem>>, vector<1x8x128xf32>,
    %c3 = arith.constant 3 : index
    %c0_42 = arith.constant 0 : index
    %c0_43 = arith.constant 0 : index
    %91 = vector.load %arg5[%c3, %c0_42, %c0_43] : memref<9x8x128xf32, #tpu.memory_space<vmem>>, vector<1x8x128xf32>
    %92 = vector.shape_cast %91 : vector<1x8x128xf32> to vector<8x128xf32>
    %93 = vector.shape_cast %52 : vector<16x128xf32> to vector<2x8x128xf32>
    %cst_44 = arith.constant dense<0.000000e+00> : vector<8x128xf32>
    %94 = vector.multi_reduction <add>, %93, %cst_44 [0] : vector<2x8x128xf32> to vector<8x128xf32>
    %95 = arith.addf %92, %94 : vector<8x128xf32>
    %c3_45 = arith.constant 3 : index
    %c0_46 = arith.constant 0 : index
    %c0_47 = arith.constant 0 : index
    %96 = vector.load %arg5[%c3_45, %c0_46, %c0_47] : memref<9x8x128xf32, #tpu.memory_space<vmem>>, vector<1x8x128xf32>
    %97 = vector.shape_cast %96 : vector<1x8x128xf32> to vector<8x128xf32>
    %98 = vector.shape_cast %95 : vector<8x128xf32> to vector<1x8x128xf32>
    tpu.vector_store %arg5[%c3_45, %c0_46, %c0_47], %98 {strides = array<i32>} : memref<9x8x128xf32, #tpu.memory_space<vmem>>, vector<1x8x128xf32>,
    %c4 = arith.constant 4 : index
    %c0_48 = arith.constant 0 : index
    %c0_49 = arith.constant 0 : index
    %99 = vector.load %arg5[%c4, %c0_48, %c0_49] : memref<9x8x128xf32, #tpu.memory_space<vmem>>, vector<1x8x128xf32>
    %100 = vector.shape_cast %99 : vector<1x8x128xf32> to vector<8x128xf32>
    %101 = vector.shape_cast %54 : vector<16x128xf32> to vector<2x8x128xf32>
    %cst_50 = arith.constant dense<0.000000e+00> : vector<8x128xf32>
    %102 = vector.multi_reduction <add>, %101, %cst_50 [0] : vector<2x8x128xf32> to vector<8x128xf32>
    %103 = arith.addf %100, %102 : vector<8x128xf32>
    %c4_51 = arith.constant 4 : index
    %c0_52 = arith.constant 0 : index
    %c0_53 = arith.constant 0 : index
    %104 = vector.load %arg5[%c4_51, %c0_52, %c0_53] : memref<9x8x128xf32, #tpu.memory_space<vmem>>, vector<1x8x128xf32>
    %105 = vector.shape_cast %104 : vector<1x8x128xf32> to vector<8x128xf32>
    %106 = vector.shape_cast %103 : vector<8x128xf32> to vector<1x8x128xf32>
    tpu.vector_store %arg5[%c4_51, %c0_52, %c0_53], %106 {strides = array<i32>} : memref<9x8x128xf32, #tpu.memory_space<vmem>>, vector<1x8x128xf32>,
    %c5 = arith.constant 5 : index
    %c0_54 = arith.constant 0 : index
    %c0_55 = arith.constant 0 : index
    %107 = vector.load %arg5[%c5, %c0_54, %c0_55] : memref<9x8x128xf32, #tpu.memory_space<vmem>>, vector<1x8x128xf32>
    %108 = vector.shape_cast %107 : vector<1x8x128xf32> to vector<8x128xf32>
    %109 = vector.shape_cast %56 : vector<16x128xf32> to vector<2x8x128xf32>
    %cst_56 = arith.constant dense<0.000000e+00> : vector<8x128xf32>
    %110 = vector.multi_reduction <add>, %109, %cst_56 [0] : vector<2x8x128xf32> to vector<8x128xf32>
    %111 = arith.addf %108, %110 : vector<8x128xf32>
    %c5_57 = arith.constant 5 : index
    %c0_58 = arith.constant 0 : index
    %c0_59 = arith.constant 0 : index
    %112 = vector.load %arg5[%c5_57, %c0_58, %c0_59] : memref<9x8x128xf32, #tpu.memory_space<vmem>>, vector<1x8x128xf32>
    %113 = vector.shape_cast %112 : vector<1x8x128xf32> to vector<8x128xf32>
    %114 = vector.shape_cast %111 : vector<8x128xf32> to vector<1x8x128xf32>
    tpu.vector_store %arg5[%c5_57, %c0_58, %c0_59], %114 {strides = array<i32>} : memref<9x8x128xf32, #tpu.memory_space<vmem>>, vector<1x8x128xf32>,
    %c6 = arith.constant 6 : index
    %c0_60 = arith.constant 0 : index
    %c0_61 = arith.constant 0 : index
    %115 = vector.load %arg5[%c6, %c0_60, %c0_61] : memref<9x8x128xf32, #tpu.memory_space<vmem>>, vector<1x8x128xf32>
    %116 = vector.shape_cast %115 : vector<1x8x128xf32> to vector<8x128xf32>
    %117 = vector.shape_cast %59 : vector<16x128xf32> to vector<2x8x128xf32>
    %cst_62 = arith.constant dense<0.000000e+00> : vector<8x128xf32>
    %118 = vector.multi_reduction <add>, %117, %cst_62 [0] : vector<2x8x128xf32> to vector<8x128xf32>
    %119 = arith.addf %116, %118 : vector<8x128xf32>
    %c6_63 = arith.constant 6 : index
    %c0_64 = arith.constant 0 : index
    %c0_65 = arith.constant 0 : index
    %120 = vector.load %arg5[%c6_63, %c0_64, %c0_65] : memref<9x8x128xf32, #tpu.memory_space<vmem>>, vector<1x8x128xf32>
    %121 = vector.shape_cast %120 : vector<1x8x128xf32> to vector<8x128xf32>
    %122 = vector.shape_cast %119 : vector<8x128xf32> to vector<1x8x128xf32>
    tpu.vector_store %arg5[%c6_63, %c0_64, %c0_65], %122 {strides = array<i32>} : memref<9x8x128xf32, #tpu.memory_space<vmem>>, vector<1x8x128xf32>,
    %c7 = arith.constant 7 : index
    %c0_66 = arith.constant 0 : index
    %c0_67 = arith.constant 0 : index
    %123 = vector.load %arg5[%c7, %c0_66, %c0_67] : memref<9x8x128xf32, #tpu.memory_space<vmem>>, vector<1x8x128xf32>
    %124 = vector.shape_cast %123 : vector<1x8x128xf32> to vector<8x128xf32>
    %125 = vector.shape_cast %63 : vector<16x128xf32> to vector<2x8x128xf32>
    %cst_68 = arith.constant dense<0.000000e+00> : vector<8x128xf32>
    %126 = vector.multi_reduction <add>, %125, %cst_68 [0] : vector<2x8x128xf32> to vector<8x128xf32>
    %127 = arith.addf %124, %126 : vector<8x128xf32>
    %c7_69 = arith.constant 7 : index
    %c0_70 = arith.constant 0 : index
    %c0_71 = arith.constant 0 : index
    %128 = vector.load %arg5[%c7_69, %c0_70, %c0_71] : memref<9x8x128xf32, #tpu.memory_space<vmem>>, vector<1x8x128xf32>
    %129 = vector.shape_cast %128 : vector<1x8x128xf32> to vector<8x128xf32>
    %130 = vector.shape_cast %127 : vector<8x128xf32> to vector<1x8x128xf32>
    tpu.vector_store %arg5[%c7_69, %c0_70, %c0_71], %130 {strides = array<i32>} : memref<9x8x128xf32, #tpu.memory_space<vmem>>, vector<1x8x128xf32>,
    %c8 = arith.constant 8 : index
    %c0_72 = arith.constant 0 : index
    %c0_73 = arith.constant 0 : index
    %131 = vector.load %arg5[%c8, %c0_72, %c0_73] : memref<9x8x128xf32, #tpu.memory_space<vmem>>, vector<1x8x128xf32>
    %132 = vector.shape_cast %131 : vector<1x8x128xf32> to vector<8x128xf32>
    %133 = vector.shape_cast %66 : vector<16x128xf32> to vector<2x8x128xf32>
    %cst_74 = arith.constant dense<0.000000e+00> : vector<8x128xf32>
    %134 = vector.multi_reduction <add>, %133, %cst_74 [0] : vector<2x8x128xf32> to vector<8x128xf32>
    %135 = arith.addf %132, %134 : vector<8x128xf32>
    %c8_75 = arith.constant 8 : index
    %c0_76 = arith.constant 0 : index
    %c0_77 = arith.constant 0 : index
    %136 = vector.load %arg5[%c8_75, %c0_76, %c0_77] : memref<9x8x128xf32, #tpu.memory_space<vmem>>, vector<1x8x128xf32>
    %137 = vector.shape_cast %136 : vector<1x8x128xf32> to vector<8x128xf32>
    %138 = vector.shape_cast %135 : vector<8x128xf32> to vector<1x8x128xf32>
    tpu.vector_store %arg5[%c8_75, %c0_76, %c0_77], %138 {strides = array<i32>} : memref<9x8x128xf32, #tpu.memory_space<vmem>>, vector<1x8x128xf32>,
    %c0_i32_78 = arith.constant 0 : i32
    %139 = arith.cmpi eq, %arg1, %c0_i32_78 : i32
    %140 = arith.extui %139 : i1 to i32
    %c0_i32_79 = arith.constant 0 : i32
    %141 = arith.cmpi ne, %140, %c0_i32_79 : i32
    scf.if %141 {
      %c0_80 = arith.constant 0 : index
      %c0_81 = arith.constant 0 : index
      %c0_82 = arith.constant 0 : index
      %142 = vector.load %arg5[%c0_80, %c0_81, %c0_82] : memref<9x8x128xf32, #tpu.memory_space<vmem>>, vector<9x8x128xf32>
      %c0_83 = arith.constant 0 : index
      %c0_84 = arith.constant 0 : index
      %c0_85 = arith.constant 0 : index
      %c0_86 = arith.constant 0 : index
      %143 = vector.load %arg4[%c0_83, %c0_84, %c0_85, %c0_86] : memref<1x9x8x128xf32, #tpu.memory_space<vmem>>, vector<1x9x8x128xf32>
      %144 = vector.shape_cast %143 : vector<1x9x8x128xf32> to vector<9x8x128xf32>
      %145 = vector.shape_cast %142 : vector<9x8x128xf32> to vector<1x9x8x128xf32>
      tpu.vector_store %arg4[%c0_83, %c0_84, %c0_85, %c0_86], %145 {strides = array<i32>} : memref<1x9x8x128xf32, #tpu.memory_space<vmem>>, vector<1x9x8x128xf32>,
    } else {
    }
    return
  }
  func.func @transform_0(%arg0: i32, %arg1: i32) -> (i32, i32) {
    %c1_i32 = arith.constant 1 : i32
    %0 = arith.muli %arg0, %c1_i32 : i32
    %1 = arith.addi %0, %arg1 : i32
    %c0_i32 = arith.constant 0 : i32
    %2 = arith.minsi %1, %c0_i32 : i32
    %c0_i32_0 = arith.constant 0 : i32
    %c0_i32_1 = arith.constant 0 : i32
    return %2, %c0_i32_0 : i32, i32
  }
  func.func @transform_1(%arg0: i32, %arg1: i32) -> (i32, i32) {
    %c1_i32 = arith.constant 1 : i32
    %0 = arith.muli %arg0, %c1_i32 : i32
    %1 = arith.addi %0, %arg1 : i32
    %c0_i32 = arith.constant 0 : i32
    %2 = arith.minsi %1, %c0_i32 : i32
    %c0_i32_0 = arith.constant 0 : i32
    %c0_i32_1 = arith.constant 0 : i32
    return %2, %c0_i32_0 : i32, i32
  }
  func.func @transform_2(%arg0: i32, %arg1: i32) -> (i32, i32, i32, i32) {
    %c0_i32 = arith.constant 0 : i32
    %c0_i32_0 = arith.constant 0 : i32
    %c0_i32_1 = arith.constant 0 : i32
    %c0_i32_2 = arith.constant 0 : i32
    return %arg0, %c0_i32, %c0_i32_0, %c0_i32_1 : i32, i32, i32, i32
  }
}

</mosaic_0001>

<llo_original>
// kernel: tpu_custom_call.1
$region0: #{tpu_custom_call.1}
  #allocation0 [shape = 'u32[]', space=smem, size = 0x4, offset = 0x4, fixed_abs, tag = 'smem constant byte address 0x4 - core index']
  #allocation1 [shape = 'u32[144,128]{1,0:T(1,128)}', space=vmem, size = 0x12000, scoped, tag = 'internal scratch']
  #allocation2 [shape = 'f32[9,8,128]{2,1,0:T(8,128)}', space=vmem, size = 0x9000, scoped, tag = 'scratch operand']
  %s0 = inlined_call_operand.hbm [shape: f32[16,128], index: 0, kind: input, shape index: {}]
  %s1 = inlined_call_operand.hbm [shape: f32[16,128], index: 1, kind: input, shape index: {}]
  %s2 = inlined_call_operand.hbm [shape: f32[2,9,8,128], index: 2, kind: output, shape index: {}]
  %s3 = sld [smem:[#allocation0]]
  $region57: #{tpu_custom_call.1} parent=0
    _
  %s5 = ssub.s32 1, %s3
  %s6 = scalar_select 0, %s5, %s3
  $region1: #{tpu_custom_call.1} parent=0
    #allocation3 [shape = 'u8[16384]{0}', space=vmem, size = 0x4000, scoped, tag = 'input window, operand 0']
    #allocation4 [shape = 's32[2]{0}', space=sflag, size = 0x8, scoped, tag = 'scoped memory for tpu_custom_call.1']
    #allocation5 [shape = 's32[2]{0}', space=sflag, size = 0x8, scoped, tag = 'scoped memory for tpu_custom_call.1']
    #allocation6 [shape = 'u8[16384]{0}', space=vmem, size = 0x4000, scoped, tag = 'input window, operand 1']
    #allocation7 [shape = 's32[2]{0}', space=sflag, size = 0x8, scoped, tag = 'scoped memory for tpu_custom_call.1']
    #allocation8 [shape = 'u8[73728]{0}', space=vmem, size = 0x12000, scoped, tag = 'output window, operand 0']
    %7 = vsyncpa [#allocation4], 0
    %s8 = scalar_lea.sflag [#allocation4], 1
    %9 = vsyncpa %s8, 0
    %10 = vsyncpa [#allocation7], 0
    %s11 = scalar_lea.sflag [#allocation7], 1
    %12 = vsyncpa %s11, 0
    %13 = vsyncpa [#allocation5], 0
    %s14 = scalar_lea.sflag [#allocation5], 1
    %15 = vsyncpa %s14, 0
    loop: start=0, step=1, limit=4
    $region2: #{tpu_custom_call.1} parent=1 // loop_pre_header
      _
    $region3: #{tpu_custom_call.1} parent=1 // loop_header
      %s17 = sphi 0, %s21
      %p18 = scmp.ge.s32.totalorder %s17, 4
      %s24 = sphi 0, %s36
      %s25 = sphi 0, %s32
      %s26 = sphi 0, %s24
      %s27 = sphi 0, %s25
      %s28 = sphi 0, %s26
      %s29 = sphi 0, %s27
      %s45 = sphi 0, %s47
      %s48 = sphi 0, %s45
      %s49 = sphi 0, %s48
      %s65 = sphi 0, %s49
      %s77 = sphi 0, %s79
      %s80 = sphi 0, %s77
      %s81 = sphi 0, %s80
      %s97 = sphi 0, %s81
      %s103 = sphi 0, %s105
      %s106 = sphi 0, %s103
      %s107 = sphi 0, %s106
      %s123 = sphi 0, %s107
    $region4: #{tpu_custom_call.1} parent=1 // loop_header_branch
      %20 = sbr.rel (%p18) target = $region8
    $region5: #{tpu_custom_call.1} parent=1 // loop_body
      %s22 = ssub.s32 %s17, 1
      %s23 = ssub.s32 %s17, 2
      %s30 = sadd.s32 1, %s25
      %p31 = scmp.ge.s32.totalorder %s30, 1
      %s32 = scalar_select %p31, 0, %s30
      %s33 = sadd.s32 1, %s24
      %s34 = scalar_select %p31, %s33, %s24
      %p35 = scmp.ge.s32.totalorder %s34, 2
      %s36 = scalar_select %p35, 0, %s34
      %s37 = sadd.s32 %s24, %s25
      %p38 = scmp.lt.s32.totalorder %s37, 0
      %s39 = scalar_select %p38, %s37, 0
      %s40 = sadd.s32 %s36, %s32
      %p41 = scmp.lt.s32.totalorder %s40, 0
      %s42 = scalar_select %p41, %s40, 0
      %s43 = ssub.s32 %s39, %s42
      %p44 = scmp.eq.s32.totalorder %s43, 0
      %s46 = sadd.s32 %s45, 1
      %s47 = scalar_select %p44, %s45, %s46
      %p50 = pneg %p44
      %p51 = scmp.eq.s32.totalorder %s17, 1
      %p52 = por %p50, %p51
      %p53 = scmp.ne.s32.totalorder %s45, %s48
      %p54 = scmp.eq.s32.totalorder %s17, 0
      %p55 = por %p53, %p54
      %p56 = scmp.ne.s32.totalorder %s45, %s48
      %p57 = scmp.eq.s32.totalorder %s22, 1
      %p58 = por %p56, %p57
      %p59 = scmp.ne.s32.totalorder %s48, %s49
      %p60 = scmp.eq.s32.totalorder %s22, 0
      %p61 = por %p59, %p60
      %p62 = scmp.ne.s32.totalorder %s48, %s49
      %p63 = scmp.eq.s32.totalorder %s23, 1
      %p64 = por %p62, %p63
      %p66 = scmp.ne.s32.totalorder %s49, %s65
      %p67 = scmp.eq.s32.totalorder %s23, 0
      %p68 = por %p66, %p67
      %s69 = sadd.s32 %s24, %s25
      %p70 = scmp.lt.s32.totalorder %s69, 0
      %s71 = scalar_select %p70, %s69, 0
      %s72 = sadd.s32 %s36, %s32
      %p73 = scmp.lt.s32.totalorder %s72, 0
      %s74 = scalar_select %p73, %s72, 0
      %s75 = ssub.s32 %s71, %s74
      %p76 = scmp.eq.s32.totalorder %s75, 0
      %s78 = sadd.s32 %s77, 1
      %s79 = scalar_select %p76, %s77, %s78
      %p82 = pneg %p76
      %p83 = scmp.eq.s32.totalorder %s17, 1
      %p84 = por %p82, %p83
      %p85 = scmp.ne.s32.totalorder %s77, %s80
      %p86 = scmp.eq.s32.totalorder %s17, 0
      %p87 = por %p85, %p86
      %p88 = scmp.ne.s32.totalorder %s77, %s80
      %p89 = scmp.eq.s32.totalorder %s22, 1
      %p90 = por %p88, %p89
      %p91 = scmp.ne.s32.totalorder %s80, %s81
      %p92 = scmp.eq.s32.totalorder %s22, 0
      %p93 = por %p91, %p92
      %p94 = scmp.ne.s32.totalorder %s80, %s81
      %p95 = scmp.eq.s32.totalorder %s23, 1
      %p96 = por %p94, %p95
      %p98 = scmp.ne.s32.totalorder %s81, %s97
      %p99 = scmp.eq.s32.totalorder %s23, 0
      %p100 = por %p98, %p99
      %s101 = ssub.s32 %s24, %s36
      %p102 = scmp.eq.s32.totalorder %s101, 0
      %s104 = sadd.s32 %s103, 1
      %s105 = scalar_select %p102, %s103, %s104
      %p108 = pneg %p102
      %p109 = scmp.eq.s32.totalorder %s17, 1
      %p110 = por %p108, %p109
      %p111 = scmp.ne.s32.totalorder %s103, %s106
      %p112 = scmp.eq.s32.totalorder %s17, 0
      %p113 = por %p111, %p112
      %p114 = scmp.ne.s32.totalorder %s103, %s106
      %p115 = scmp.eq.s32.totalorder %s22, 1
      %p116 = por %p114, %p115
      %p117 = scmp.ne.s32.totalorder %s106, %s107
      %p118 = scmp.eq.s32.totalorder %s22, 0
      %p119 = por %p117, %p118
      %p120 = scmp.ne.s32.totalorder %s106, %s107
      %p121 = scmp.eq.s32.totalorder %s23, 1
      %p122 = por %p120, %p121
      %p124 = scmp.ne.s32.totalorder %s107, %s123
      %p125 = scmp.eq.s32.totalorder %s23, 0
      %p126 = por %p124, %p125
      %p127 = scmp.le.s32.totalorder 1, %s17
      %p128 = scmp.lt.s32.totalorder %s17, 3
      %p129 = pnand %p127, %p128
      %p130 = pneg %p129
      // Predicated region
      $region9: #{tpu_custom_call.1} parent=5 // pred_check
        _
      $region10: #{tpu_custom_call.1} parent=5 // pred_check_branch
        %132 = sbr.rel (%p129) target = $region12
      $region11: #{tpu_custom_call.1} parent=5 // pred_region
        %s133 = ssub.s32 %s17, 1
      $region12: #{tpu_custom_call.1} parent=5 // pred_fallthru
        _
      %p134 = scmp.lt.s32.totalorder %s17, 2
      // Predicated region
      $region13: #{tpu_custom_call.1} parent=5 // pred_check
        %p135 = pneg %p134
      $region14: #{tpu_custom_call.1} parent=5 // pred_check_branch
        %137 = sbr.rel (%p135) target = $region16
      $region15: #{tpu_custom_call.1} parent=5 // pred_region
        // Predicated region
        $region17: #{tpu_custom_call.1} parent=15 // pred_check
          %p138 = pneg %p55
        $region18: #{tpu_custom_call.1} parent=15 // pred_check_branch
          %140 = sbr.rel (%p138) target = $region20
        $region19: #{tpu_custom_call.1} parent=15 // pred_region
          %s141 = sand.u32 %s45, 1
          %s142 = scalar_lea.sflag [#allocation4], %s141
          %s143 = sand.u32 %s45, 1
          %s144 = smul.addr %s143, 16
          %s145 = scalar_lea.vmem [#allocation3], %s144
          %s146 = sadd.s32 %s24, %s25
          %p147 = scmp.lt.s32.totalorder %s146, 0
          %s148 = scalar_select %p147, %s146, 0
          %s149 = smul.u32 2, %s148
          %s151 = ssub.s32 256, 256
          %152 = vsyncadd %s142, %s151
          %s153 = smul.addr %s149, 128
          %s154 = scalar_lea.hbm %s0, %s153
          %s155 = sshll.u32 %s145, 4
          %s156 = int_to_ptr.vmem [resolvable:$true] %s155
          %161 = dma.hbm_to_vmem [thread:$0]  %s154, 256, %s156, %s142, 128, 128, 8
        $region20: #{tpu_custom_call.1} parent=15 // pred_fallthru
          _
        // Predicated region
        $region21: #{tpu_custom_call.1} parent=15 // pred_check
          %p162 = pneg %p87
        $region22: #{tpu_custom_call.1} parent=15 // pred_check_branch
          %164 = sbr.rel (%p162) target = $region24
        $region23: #{tpu_custom_call.1} parent=15 // pred_region
          %s165 = sand.u32 %s77, 1
          %s166 = scalar_lea.sflag [#allocation7], %s165
          %s167 = sand.u32 %s77, 1
          %s168 = smul.addr %s167, 16
          %s169 = scalar_lea.vmem [#allocation6], %s168
          %s170 = sadd.s32 %s24, %s25
          %p171 = scmp.lt.s32.totalorder %s170, 0
          %s172 = scalar_select %p171, %s170, 0
          %s173 = smul.u32 2, %s172
          %s175 = ssub.s32 256, 256
          %176 = vsyncadd %s166, %s175
          %s177 = smul.addr %s173, 128
          %s178 = scalar_lea.hbm %s1, %s177
          %s179 = sshll.u32 %s169, 4
          %s180 = int_to_ptr.vmem [resolvable:$true] %s179
          %185 = dma.hbm_to_vmem [thread:$0]  %s178, 256, %s180, %s166, 128, 128, 8
        $region24: #{tpu_custom_call.1} parent=15 // pred_fallthru
          _
      $region16: #{tpu_custom_call.1} parent=5 // pred_fallthru
        _
      %p186 = scmp.le.s32.totalorder 1, %s17
      %p187 = scmp.lt.s32.totalorder %s17, 3
      %p188 = pnand %p186, %p187
      %p189 = pneg %p188
      // Predicated region
      $region25: #{tpu_custom_call.1} parent=5 // pred_check
        _
      $region26: #{tpu_custom_call.1} parent=5 // pred_check_branch
        %191 = sbr.rel (%p188) target = $region28
      $region27: #{tpu_custom_call.1} parent=5 // pred_region
        %s192 = ssub.s32 %s17, 1
        %s193 = sand.u32 %s48, 1
        %s194 = scalar_lea.sflag [#allocation4], %s193
        %s195 = sand.u32 %s48, 1
        %s196 = smul.addr %s195, 16
        %s197 = scalar_lea.vmem [#allocation3], %s196
        // Predicated region
        $region29: #{tpu_custom_call.1} parent=27 // pred_check
          %p198 = pneg %p61
        $region30: #{tpu_custom_call.1} parent=27 // pred_check_branch
          %200 = sbr.rel (%p198) target = $region32
        $region31: #{tpu_custom_call.1} parent=27 // pred_region
          %201 = dma.done %s194, 256
        $region32: #{tpu_custom_call.1} parent=27 // pred_fallthru
          _
        %s202 = sand.u32 %s80, 1
        %s203 = scalar_lea.sflag [#allocation7], %s202
        %s204 = sand.u32 %s80, 1
        %s205 = smul.addr %s204, 16
        %s206 = scalar_lea.vmem [#allocation6], %s205
        // Predicated region
        $region33: #{tpu_custom_call.1} parent=27 // pred_check
          %p207 = pneg %p93
        $region34: #{tpu_custom_call.1} parent=27 // pred_check_branch
          %209 = sbr.rel (%p207) target = $region36
        $region35: #{tpu_custom_call.1} parent=27 // pred_region
          %210 = dma.done %s203, 256
        $region36: #{tpu_custom_call.1} parent=27 // pred_fallthru
          _
        %s211 = sand.u32 %s48, 1
        %s212 = scalar_lea.sflag [#allocation4], %s211
        %s213 = sand.u32 %s48, 1
        %s214 = smul.addr %s213, 16
        %s215 = scalar_lea.vmem [#allocation3], %s214
        %p216 = pneg %p61
        %p217 = pneg %p58
        %s218 = sand.u32 %s80, 1
        %s219 = scalar_lea.sflag [#allocation7], %s218
        %s220 = sand.u32 %s80, 1
        %s221 = smul.addr %s220, 16
        %s222 = scalar_lea.vmem [#allocation6], %s221
        %p223 = pneg %p93
        %p224 = pneg %p90
        %p225 = pneg %p119
        %p226 = pneg %p116
        %s227 = sand.u32 %s106, 1
        %s228 = scalar_lea.sflag [#allocation5], %s227
        %s229 = sand.u32 %s106, 1
        %s230 = smul.addr %s229, 72
        %s231 = scalar_lea.vmem [#allocation8], %s230
        %s232 = sadd.s32 %s26, %s27
        %p233 = scmp.lt.s32.totalorder %s232, 0
        %s234 = scalar_select %p233, %s232, 0
        %s235 = smul.u32 2, %s234
        %s236 = sadd.s32 %s26, %s27
        %p237 = scmp.lt.s32.totalorder %s236, 0
        %s238 = scalar_select %p237, %s236, 0
        %s239 = smul.u32 2, %s238
        %p240 = scmp.eq.s32.totalorder %s27, 0
        // Predicated region
        $region37: #{tpu_custom_call.1} parent=27 // pred_check
          %p241 = pneg %p240
        $region38: #{tpu_custom_call.1} parent=27 // pred_check_branch
          %243 = sbr.rel (%p241) target = $region40
        $region39: #{tpu_custom_call.1} parent=27 // pred_region
          %244 = vst [vmem:[#allocation2] sm:$0xff] 0.0
          %245 = vst [vmem:[#allocation2 + $0x8] sm:$0xff] 0.0
          %246 = vst [vmem:[#allocation2 + $0x10] sm:$0xff] 0.0
          %247 = vst [vmem:[#allocation2 + $0x18] sm:$0xff] 0.0
          %248 = vst [vmem:[#allocation2 + $0x20] sm:$0xff] 0.0
          %249 = vst [vmem:[#allocation2 + $0x28] sm:$0xff] 0.0
          %250 = vst [vmem:[#allocation2 + $0x30] sm:$0xff] 0.0
          %251 = vst [vmem:[#allocation2 + $0x38] sm:$0xff] 0.0
          %252 = vst [vmem:[#allocation2 + $0x40] sm:$0xff] 0.0
        $region40: #{tpu_custom_call.1} parent=27 // pred_fallthru
          _
        %v253 = vld [vmem:[%s197] sm:$0xff]
        %v254 = vld [vmem:[%s197 + $0x8] sm:$0xff]
        %v255 = vld [vmem:[%s206] sm:$0xff]
        %v256 = vld [vmem:[%s206 + $0x8] sm:$0xff]
        %s257 = sadd.s32 %s26, %s27
        %v258 = vlaneseq
        %v259 = vshrl.u32 %v258, 7
        %v260 = vadd.s32 %v259, 8
        %v261 = vlaneseq
        %v262 = vand.u32 %v261, 127
        %s263 = smul.u32 %s257, 16
        %v264 = vstv %s263
        %v265 = vadd.s32 %v264, %v259
        %v266 = vadd.s32 %v264, %v260
        %v267 = vmul.u32 %v265, 128
        %v268 = vmul.u32 %v266, 128
        %v269 = vadd.s32 %v267, %v262
        %v270 = vadd.s32 %v268, %v262
        %vm271 = vcmp.lt.s32.totalorder %v269, 2048
        %vm272 = vcmp.lt.s32.totalorder %v270, 2048
        %vm273 = vcmp.gt.f32.partialorder %v255, 0.1
        %vm274 = vcmp.gt.f32.partialorder %v256, 0.1
        %vm275 = vmand %vm271, %vm273
        %vm276 = vmand %vm272, %vm274
        %v277 = vrcp.pop %v255
        %v278 = vmul.f32 1.0, %v277
        %v279 = vrcp.pop %v256
        %v280 = vmul.f32 1.0, %v279
        %v281 = vrcp.pop %v253
        %v282 = vmul.f32 1.0, %v281
        %v283 = vrcp.pop %v254
        %v284 = vmul.f32 1.0, %v283
        %v285 = vmul.f32 %v255, %v282
        %v286 = vmul.f32 %v256, %v284
        %v287 = vmul.f32 %v253, %v278
        %v288 = vmul.f32 %v254, %v280
        %v289 = vmax.f32 %v285, %v287
        %v290 = vmax.f32 %v286, %v288
        %v291 = vsub.f32 %v255, %v253
        %v292 = vsub.f32 %v256, %v254
        %v293 = vmul.f32 %v291, %v291
        %v294 = vmul.f32 %v292, %v292
        %v295 = vlog2.pop %v289
        %v296 = vmul.f32 %v295, 0.6931472
        %v297 = vlog2.pop %v290
        %v298 = vmul.f32 %v297, 0.6931472
        %vm299 = vcmp.eq.f32.partialorder %v296, %v296
        %vm300 = vcmp.eq.f32.partialorder %v298, %v298
        %vm301 = vmand %vm275, %vm299
        %vm302 = vmand %vm276, %vm300
        %v303 = vsel %vm275, 1.0, 0.0
        %v304 = vsel %vm276, 1.0, 0.0
        %vm305 = vcmp.lt.f32.partialorder %v289, 1.25
        %vm306 = vcmp.lt.f32.partialorder %v290, 1.25
        %vm307 = vmand %vm275, %vm305
        %vm308 = vmand %vm276, %vm306
        %v309 = vsel %vm307, 1.0, 0.0
        %v310 = vsel %vm308, 1.0, 0.0
        %vm311 = vcmp.lt.f32.partialorder %v289, 1.5625
        %vm312 = vcmp.lt.f32.partialorder %v290, 1.5625
        %vm313 = vmand %vm275, %vm311
        %vm314 = vmand %vm276, %vm312
        %v315 = vsel %vm313, 1.0, 0.0
        %v316 = vsel %vm314, 1.0, 0.0
        %vm317 = vcmp.lt.f32.partialorder %v289, 1.953125
        %vm318 = vcmp.lt.f32.partialorder %v290, 1.953125
        %vm319 = vmand %vm275, %vm317
        %vm320 = vmand %vm276, %vm318
        %v321 = vsel %vm319, 1.0, 0.0
        %v322 = vsel %vm320, 1.0, 0.0
        %v323 = vsel %vm275, %v293, 0.0
        %v324 = vsel %vm276, %v294, 0.0
        %v325 = vsel %vm301, %v296, 0.0
        %v326 = vsel %vm302, %v298, 0.0
        %v327 = vsel %vm301, 1.0, 0.0
        %v328 = vsel %vm302, 1.0, 0.0
        %v329 = vand.u32 2147483647, %v291
        %v330 = vand.u32 2147483647, %v292
        %v331 = vmul.f32 %v329, %v278
        %v332 = vmul.f32 %v330, %v280
        %v333 = vsel %vm275, %v331, 0.0
        %v334 = vsel %vm276, %v332, 0.0
        %v335 = vmul.f32 %v293, %v278
        %v336 = vmul.f32 %v294, %v280
        %v337 = vsel %vm275, %v335, 0.0
        %v338 = vsel %vm276, %v336, 0.0
        %v339 = vld [vmem:[#allocation2] sm:$0xff]
        %v340 = vadd.f32 %v303, %v304
        %v341 = vadd.f32 %v339, %v340
        %342 = vst [vmem:[#allocation2] sm:$0xff] %v341
        %s343 = scalar_lea.vmem [#allocation2], 8
        %v344 = vld [vmem:[%s343] sm:$0xff]
        %v345 = vadd.f32 %v309, %v310
        %v346 = vadd.f32 %v344, %v345
        %347 = vst [vmem:[%s343] sm:$0xff] %v346
        %s348 = scalar_lea.vmem [#allocation2], 16
        %v349 = vld [vmem:[%s348] sm:$0xff]
        %v350 = vadd.f32 %v315, %v316
        %v351 = vadd.f32 %v349, %v350
        %352 = vst [vmem:[%s348] sm:$0xff] %v351
        %s353 = scalar_lea.vmem [#allocation2], 24
        %v354 = vld [vmem:[%s353] sm:$0xff]
        %v355 = vadd.f32 %v321, %v322
        %v356 = vadd.f32 %v354, %v355
        %357 = vst [vmem:[%s353] sm:$0xff] %v356
        %s358 = scalar_lea.vmem [#allocation2], 32
        %v359 = vld [vmem:[%s358] sm:$0xff]
        %v360 = vadd.f32 %v323, %v324
        %v361 = vadd.f32 %v359, %v360
        %362 = vst [vmem:[%s358] sm:$0xff] %v361
        %s363 = scalar_lea.vmem [#allocation2], 40
        %v364 = vld [vmem:[%s363] sm:$0xff]
        %v365 = vadd.f32 %v325, %v326
        %v366 = vadd.f32 %v364, %v365
        %367 = vst [vmem:[%s363] sm:$0xff] %v366
        %s368 = scalar_lea.vmem [#allocation2], 48
        %v369 = vld [vmem:[%s368] sm:$0xff]
        %v370 = vadd.f32 %v327, %v328
        %v371 = vadd.f32 %v369, %v370
        %372 = vst [vmem:[%s368] sm:$0xff] %v371
        %s373 = scalar_lea.vmem [#allocation2], 56
        %v374 = vld [vmem:[%s373] sm:$0xff]
        %v375 = vadd.f32 %v333, %v334
        %v376 = vadd.f32 %v374, %v375
        %377 = vst [vmem:[%s373] sm:$0xff] %v376
        %s378 = scalar_lea.vmem [#allocation2], 64
        %v379 = vld [vmem:[%s378] sm:$0xff]
        %v380 = vadd.f32 %v337, %v338
        %v381 = vadd.f32 %v379, %v380
        %382 = vst [vmem:[%s378] sm:$0xff] %v381
        // Predicated region
        $region41: #{tpu_custom_call.1} parent=27 // pred_check
          %p383 = pneg %p240
        $region42: #{tpu_custom_call.1} parent=27 // pred_check_branch
          %385 = sbr.rel (%p383) target = $region44
        $region43: #{tpu_custom_call.1} parent=27 // pred_region
          %v386 = vld [vmem:[#allocation2] sm:$0xff]
          %v387 = vld [vmem:[#allocation2 + $0x8] sm:$0xff]
          %v388 = vld [vmem:[#allocation2 + $0x10] sm:$0xff]
          %v389 = vld [vmem:[#allocation2 + $0x18] sm:$0xff]
          %v390 = vld [vmem:[#allocation2 + $0x20] sm:$0xff]
          %v391 = vld [vmem:[#allocation2 + $0x28] sm:$0xff]
          %v392 = vld [vmem:[#allocation2 + $0x30] sm:$0xff]
          %v393 = vld [vmem:[#allocation2 + $0x38] sm:$0xff]
          %v394 = vld [vmem:[#allocation2 + $0x40] sm:$0xff]
          %395 = vst [vmem:[%s231] sm:$0xff] %v386
          %396 = vst [vmem:[%s231 + $0x8] sm:$0xff] %v387
          %397 = vst [vmem:[%s231 + $0x10] sm:$0xff] %v388
          %398 = vst [vmem:[%s231 + $0x18] sm:$0xff] %v389
          %399 = vst [vmem:[%s231 + $0x20] sm:$0xff] %v390
          %400 = vst [vmem:[%s231 + $0x28] sm:$0xff] %v391
          %401 = vst [vmem:[%s231 + $0x30] sm:$0xff] %v392
          %402 = vst [vmem:[%s231 + $0x38] sm:$0xff] %v393
          %403 = vst [vmem:[%s231 + $0x40] sm:$0xff] %v394
        $region44: #{tpu_custom_call.1} parent=27 // pred_fallthru
          _
        %s404 = sand.u32 %s106, 1
        %s405 = scalar_lea.sflag [#allocation5], %s404
        %s406 = sand.u32 %s106, 1
        %s407 = smul.addr %s406, 72
        %s408 = scalar_lea.vmem [#allocation8], %s407
        // Predicated region
        $region45: #{tpu_custom_call.1} parent=27 // pred_check
          %p409 = pneg %p116
        $region46: #{tpu_custom_call.1} parent=27 // pred_check_branch
          %411 = sbr.rel (%p409) target = $region48
        $region47: #{tpu_custom_call.1} parent=27 // pred_region
          %s413 = ssub.s32 1152, 1152
          %414 = vsyncadd %s405, %s413
          %s415 = smul.addr %s26, 9
          %s416 = smul.addr %s415, 128
          %s417 = scalar_lea.hbm %s2, %s416
          %s418 = sshll.u32 %s408, 4
          %s419 = int_to_ptr.vmem [resolvable:$true] %s418
          %424 = dma.vmem_to_hbm [thread:$0]  %s419, 1152, %s417, %s405, 128, 128, 8
        $region48: #{tpu_custom_call.1} parent=27 // pred_fallthru
          _
      $region28: #{tpu_custom_call.1} parent=5 // pred_fallthru
        _
      %p425 = scmp.le.s32.totalorder 2, %s17
      // Predicated region
      $region49: #{tpu_custom_call.1} parent=5 // pred_check
        %p426 = pneg %p425
      $region50: #{tpu_custom_call.1} parent=5 // pred_check_branch
        %428 = sbr.rel (%p426) target = $region52
      $region51: #{tpu_custom_call.1} parent=5 // pred_region
        %s429 = ssub.s32 %s17, 2
        // Predicated region
        $region53: #{tpu_custom_call.1} parent=51 // pred_check
          %p430 = pneg %p122
        $region54: #{tpu_custom_call.1} parent=51 // pred_check_branch
          %432 = sbr.rel (%p430) target = $region56
        $region55: #{tpu_custom_call.1} parent=51 // pred_region
          %s433 = sand.u32 %s107, 1
          %s434 = scalar_lea.sflag [#allocation5], %s433
          %s435 = sand.u32 %s107, 1
          %s436 = smul.addr %s435, 72
          %s437 = scalar_lea.vmem [#allocation8], %s436
          %438 = dma.done %s434, 1152
        $region56: #{tpu_custom_call.1} parent=51 // pred_fallthru
          _
      $region52: #{tpu_custom_call.1} parent=5 // pred_fallthru
        _
    $region6: #{tpu_custom_call.1} parent=1 // loop_footer
      %s21 = sadd.s32 1, %s17
    $region7: #{tpu_custom_call.1} parent=1 // loop_footer_branch
      %16 = sbr.rel target = $region3
    $region8: #{tpu_custom_call.1} parent=1 // loop_exit
      _
    %439 = vsyncpa [#allocation4], 1
    %s440 = scalar_lea.sflag [#allocation4], 1
    %441 = vsyncpa %s440, 1
    %442 = vsyncpa [#allocation7], 1
    %s443 = scalar_lea.sflag [#allocation7], 1
    %444 = vsyncpa %s443, 1
    %445 = vsyncpa [#allocation5], 1
    %s446 = scalar_lea.sflag [#allocation5], 1
    %447 = vsyncpa %s446, 1

</llo_original>
